<compile_context>
chip_gen: v5e
topology: v5e:2x2
jax: 0.10.0
libtpu: 0.0.40
codegen_flags: <defaults>
</compile_context>

<pallas_src>
import math

import jax
import jax.numpy as jnp
from jax.experimental import pallas as pl
from jax.experimental.pallas import tpu as pltpu

R = 2  # HRA rank (self.r = 2 in the module)

_VMEM_LIMIT_BYTES = 48 * 1024 * 1024     # below v7x's 64 MiB physical, ample on v5e/v6e
_X_TILE_BUDGET_BYTES = 20 * 1024 * 1024  # double-buffered in+out x tiles


def _hra_ffn_kernel(ua_ref, va_ref, ub_ref, vb_ref, x_ref, o_ref):
    # ua_ref/ub_ref: (R, Dp) normalized Householder directions (lane-dense rows)
    # va_ref/vb_ref: (R, Dp) folded update rows:  y = x - (x @ u^T) @ v
    # x_ref / o_ref: (TM, Dp) row tile
    x = x_ref[...].astype(jnp.float32)

    # ---- first HRA (two reflections fused) + ABS ---------------------------
    ca = jax.lax.dot_general(
        x, ua_ref[...],
        dimension_numbers=(((1,), (1,)), ((), ())),
        preferred_element_type=jnp.float32,
    )  # (TM, R)
    va = va_ref[...]
    y = x - (ca[:, 0:1] * va[0:1, :] + ca[:, 1:2] * va[1:2, :])
    y = jnp.abs(y)

    # ---- second HRA (two reflections fused) --------------------------------
    cb = jax.lax.dot_general(
        y, ub_ref[...],
        dimension_numbers=(((1,), (1,)), ((), ())),
        preferred_element_type=jnp.float32,
    )  # (TM, R)
    vb = vb_ref[...]
    out = y - (cb[:, 0:1] * vb[0:1, :] + cb[:, 1:2] * vb[1:2, :])

    o_ref[...] = out.astype(o_ref.dtype)


def _round_up(x, n):
    return ((x + n - 1) // n) * n


def _choose_tm(m, dp, itemsize, max_tm=1024):
    # Budget covers the double-buffered input + output x tiles:
    #   2 (in/out) * 2 (buffers) * tm * dp * itemsize
    tm = _X_TILE_BUDGET_BYTES // (4 * dp * itemsize)
    tm = int(max(8, min(tm, max_tm)))
    tm -= tm % 8
    tm = min(tm, _round_up(m, 8))
    return max(tm, 8)


def _fold_hra(hra_u):
    """Fold one HRA module (two reflections) into (U_rows, V_rows).

    hra_u: (d, R) un-normalized directions.  Sequential reflections fold to:
        out = x - c1*(2 u1 - 4 (u1.u2) u2) - c2*(2 u2),   ci = x . ui
    """
    un = (hra_u / jnp.linalg.norm(hra_u, axis=0, keepdims=True)).astype(jnp.float32)
    u_rows = un.T                                     # (R, d), lane-dense rows
    d12 = jnp.sum(u_rows[0] * u_rows[1])              # u1 . u2 cross term
    v_rows = 2.0 * u_rows
    v_rows = v_rows.at[0].add(-4.0 * d12 * u_rows[1])
    return u_rows, v_rows


def hra_ffn_forward(x, hra_u_a, hra_u_b, *, max_tm=1024):
    """Fused HRA_FFN forward:  HRA_a -> abs -> HRA_b  (dropout = identity).

    x:                 (batch, seq, dim)
    hra_u_a, hra_u_b:  (dim, R) un-normalized Householder directions of the
                       first and second HRA module.
    """
    b, s, d = x.shape
    assert hra_u_a.shape == (d, R) and hra_u_b.shape == (d, R)
    m = b * s

    # ---- tiny host-side precompute (hoisted out of the grid loop) ----------
    ua_rows, va_rows = _fold_hra(hra_u_a)
    ub_rows, vb_rows = _fold_hra(hra_u_b)

    # ---- pad to lane-dense feature dim and a row-tile multiple -------------
    dp = max(_round_up(d, 128), 128)
    tm = _choose_tm(m, dp, jnp.dtype(x.dtype).itemsize, max_tm=max_tm)
    mp = _round_up(m, tm)

    x2 = x.reshape(m, d)
    needs_copy = (dp != d) or (mp != m)
    if needs_copy:
        x2 = jnp.pad(x2, ((0, mp - m), (0, dp - d)))   # fresh buffer -> safe to alias
    if dp != d:
        pad = ((0, 0), (0, dp - d))
        ua_rows = jnp.pad(ua_rows, pad)
        va_rows = jnp.pad(va_rows, pad)
        ub_rows = jnp.pad(ub_rows, pad)
        vb_rows = jnp.pad(vb_rows, pad)

    param_spec = pl.BlockSpec((R, dp), lambda i: (0, 0))  # resident across grid
    out = pl.pallas_call(
        _hra_ffn_kernel,
        out_shape=jax.ShapeDtypeStruct((mp, dp), x.dtype),
        grid_spec=pltpu.PrefetchScalarGridSpec(
            num_scalar_prefetch=0,
            grid=(mp // tm,),
            in_specs=[
                param_spec,                                 # Ua
                param_spec,                                 # Va
                param_spec,                                 # Ub
                param_spec,                                 # Vb
                pl.BlockSpec((tm, dp), lambda i: (i, 0)),   # x row tile
            ],
            out_specs=pl.BlockSpec((tm, dp), lambda i: (i, 0)),
        ),
        compiler_params=pltpu.CompilerParams(
            dimension_semantics=("parallel",),
            vmem_limit_bytes=_VMEM_LIMIT_BYTES,
        ),
        # Alias output onto the freshly padded copy of x (never the caller's
        # buffer) to avoid a second M x D HBM allocation.
        input_output_aliases={4: 0} if needs_copy else {},
    )(ua_rows, va_rows, ub_rows, vb_rows, x2)

    return out[:m, :d].reshape(b, s, d)


def init_hra_u(dim, key):
    """Deterministic re-implementation of the HRA module's __init__.

    half_u = kaiming_uniform_(zeros(dim, r//2), a=sqrt(5)) -> uniform(-1, 1)
    (fan_in = 1, gain = sqrt(2/6), bound = gain*sqrt(3/fan_in) = 1), then
    hra_u = repeat_interleave(half_u, 2, dim=1) -> both columns identical.
    """
    fan_in = R // 2
    gain = math.sqrt(2.0 / (1.0 + 5.0))
    bound = gain * math.sqrt(3.0 / fan_in)
    half_u = jax.random.uniform(key, (dim, R // 2), jnp.float32,
                                minval=-bound, maxval=bound)
    return jnp.repeat(half_u, 2, axis=1)               # (dim, R)


def _hra_reference(x2d, hra_u):
    out = x2d
    for i in range(R):
        ui = hra_u[:, i:i + 1]
        ui = ui / jnp.linalg.norm(ui)
        out = out - 2.0 * (out @ ui) @ ui.T
    return out


def hra_ffn_reference(x, hra_u_a, hra_u_b):
    """Pure-JAX sequential reference matching the PyTorch HRA_FFN forward
    (dropout = identity)."""
    b, s, d = x.shape
    out = x.reshape(-1, d)
    out = _hra_reference(out, hra_u_a)
    out = jnp.abs(out)
    out = _hra_reference(out, hra_u_b)
    return out.reshape(b, s, d)


def _check(x, u_a, u_b, **kw):
    y = jax.block_until_ready(hra_ffn_forward(x, u_a, u_b, **kw))
    y_ref = hra_ffn_reference(x, u_a, u_b)
    err = jnp.max(jnp.abs(y - y_ref))
    assert jnp.allclose(y, y_ref, atol=1e-5, rtol=1e-5), f"mismatch, max abs err {err}"
    return y


if __name__ == "__main__":
    key = jax.random.PRNGKey(0)
    k_ua, k_ub, k_x, k_ua2, k_ub2, k_x2, k_ua3, k_ub3, k_x3 = jax.random.split(key, 9)

    # 1) Module-faithful init (duplicated columns -> each HRA is identity at
    #    init, so HRA_FFN(x) == |x|), small ViT-ish shape.
    batch, seq, dim = 2, 8, 32
    u_a = init_hra_u(dim, k_ua)
    u_b = init_hra_u(dim, k_ub)
    x = jax.random.normal(k_x, (batch, seq, dim), jnp.float32)
    _check(x, u_a, u_b)

    # 2) Independent columns, non-128-multiple dim, forced multi-step grid:
    #    validates the fused cross-term formula and the padding/aliasing path.
    dim2 = 160
    u_a2 = jax.random.normal(k_ua2, (dim2, R), jnp.float32)
    u_b2 = jax.random.normal(k_ub2, (dim2, R), jnp.float32)
    x2 = jax.random.normal(k_x2, (1, 24, dim2), jnp.float32)
    _check(x2, u_a2, u_b2, max_tm=8)

    # 3) Already lane-dense feature dim (no feature padding, no aliasing path).
    dim3 = 128
    u_a3 = jax.random.normal(k_ua3, (dim3, R), jnp.float32)
    u_b3 = jax.random.normal(k_ub3, (dim3, R), jnp.float32)
    x3 = jax.random.normal(k_x3, (2, 8, dim3), jnp.float32)
    _check(x3, u_a3, u_b3)

    print("KERNEL_OK")
</pallas_src>

<mosaic_0001>
module attributes {stable_mosaic.version = 11 : i64} {
  func.func @_hra_ffn_kernel(%arg0: i32, %arg1: memref<2x128xf32, #tpu.memory_space<vmem>>, %arg2: memref<2x128xf32, #tpu.memory_space<vmem>>, %arg3: memref<2x128xf32, #tpu.memory_space<vmem>>, %arg4: memref<2x128xf32, #tpu.memory_space<vmem>>, %arg5: memref<16x128xf32, #tpu.memory_space<vmem>>, %arg6: memref<16x128xf32, #tpu.memory_space<vmem>>) attributes {dimension_semantics = [#tpu.dimension_semantics<parallel>], iteration_bounds = array<i64: 1>, scalar_prefetch = 0 : i64, scratch_operands = 0 : i64, tpu.core_type = #tpu.core_type<tc>, window_params = [{pipeline_mode = #tpu.pipeline_mode<synchronous>, transform_indices = @transform_0, window_bounds = array<i64: 2, 128>}, {pipeline_mode = #tpu.pipeline_mode<synchronous>, transform_indices = @transform_1, window_bounds = array<i64: 2, 128>}, {pipeline_mode = #tpu.pipeline_mode<synchronous>, transform_indices = @transform_2, window_bounds = array<i64: 2, 128>}, {pipeline_mode = #tpu.pipeline_mode<synchronous>, transform_indices = @transform_3, window_bounds = array<i64: 2, 128>}, {transform_indices = @transform_4, window_bounds = array<i64: 16, 128>}, {transform_indices = @transform_5, window_bounds = array<i64: 16, 128>}]} {
    %c0 = arith.constant 0 : index
    %c0_0 = arith.constant 0 : index
    %0 = vector.load %arg5[%c0, %c0_0] : memref<16x128xf32, #tpu.memory_space<vmem>>, vector<16x128xf32>
    %c0_1 = arith.constant 0 : index
    %c0_2 = arith.constant 0 : index
    %1 = vector.load %arg1[%c0_1, %c0_2] : memref<2x128xf32, #tpu.memory_space<vmem>>, vector<2x128xf32>
    %cst = arith.constant dense<0.000000e+00> : vector<16x2xf32>
    %2 = tpu.matmul %0, %1, %cst {dimension_numbers = #tpu.dot_dimension_numbers<[1], [1], [0], [0], [0, 0, 1, 0], [], []>} : vector<16x128xf32>, vector<2x128xf32>, vector<16x2xf32> -> vector<16x2xf32>
    %c0_3 = arith.constant 0 : index
    %c0_4 = arith.constant 0 : index
    %3 = vector.load %arg2[%c0_3, %c0_4] : memref<2x128xf32, #tpu.memory_space<vmem>>, vector<2x128xf32>
    %4 = vector.extract_strided_slice %2 {offsets = [0, 0], sizes = [16, 1], strides = [1, 1]} : vector<16x2xf32> to vector<16x1xf32>
    %5 = vector.extract_strided_slice %3 {offsets = [0, 0], sizes = [1, 128], strides = [1, 1]} : vector<2x128xf32> to vector<1x128xf32>
    %6 = vector.broadcast %4 : vector<16x1xf32> to vector<16x128xf32>
    %7 = vector.broadcast %5 : vector<1x128xf32> to vector<16x128xf32>
    %8 = arith.mulf %6, %7 : vector<16x128xf32>
    %9 = vector.extract_strided_slice %2 {offsets = [0, 1], sizes = [16, 1], strides = [1, 1]} : vector<16x2xf32> to vector<16x1xf32>
    %10 = vector.extract_strided_slice %3 {offsets = [1, 0], sizes = [1, 128], strides = [1, 1]} : vector<2x128xf32> to vector<1x128xf32>
    %11 = vector.broadcast %9 : vector<16x1xf32> to vector<16x128xf32>
    %12 = vector.broadcast %10 : vector<1x128xf32> to vector<16x128xf32>
    %13 = arith.mulf %11, %12 : vector<16x128xf32>
    %14 = arith.addf %8, %13 : vector<16x128xf32>
    %15 = arith.subf %0, %14 : vector<16x128xf32>
    %16 = math.absf %15 : vector<16x128xf32>
    %c0_5 = arith.constant 0 : index
    %c0_6 = arith.constant 0 : index
    %17 = vector.load %arg3[%c0_5, %c0_6] : memref<2x128xf32, #tpu.memory_space<vmem>>, vector<2x128xf32>
    %cst_7 = arith.constant dense<0.000000e+00> : vector<16x2xf32>
    %18 = tpu.matmul %16, %17, %cst_7 {dimension_numbers = #tpu.dot_dimension_numbers<[1], [1], [0], [0], [0, 0, 1, 0], [], []>} : vector<16x128xf32>, vector<2x128xf32>, vector<16x2xf32> -> vector<16x2xf32>
    %c0_8 = arith.constant 0 : index
    %c0_9 = arith.constant 0 : index
    %19 = vector.load %arg4[%c0_8, %c0_9] : memref<2x128xf32, #tpu.memory_space<vmem>>, vector<2x128xf32>
    %20 = vector.extract_strided_slice %18 {offsets = [0, 0], sizes = [16, 1], strides = [1, 1]} : vector<16x2xf32> to vector<16x1xf32>
    %21 = vector.extract_strided_slice %19 {offsets = [0, 0], sizes = [1, 128], strides = [1, 1]} : vector<2x128xf32> to vector<1x128xf32>
    %22 = vector.broadcast %20 : vector<16x1xf32> to vector<16x128xf32>
    %23 = vector.broadcast %21 : vector<1x128xf32> to vector<16x128xf32>
    %24 = arith.mulf %22, %23 : vector<16x128xf32>
    %25 = vector.extract_strided_slice %18 {offsets = [0, 1], sizes = [16, 1], strides = [1, 1]} : vector<16x2xf32> to vector<16x1xf32>
    %26 = vector.extract_strided_slice %19 {offsets = [1, 0], sizes = [1, 128], strides = [1, 1]} : vector<2x128xf32> to vector<1x128xf32>
    %27 = vector.broadcast %25 : vector<16x1xf32> to vector<16x128xf32>
    %28 = vector.broadcast %26 : vector<1x128xf32> to vector<16x128xf32>
    %29 = arith.mulf %27, %28 : vector<16x128xf32>
    %30 = arith.addf %24, %29 : vector<16x128xf32>
    %31 = arith.subf %16, %30 : vector<16x128xf32>
    %c0_10 = arith.constant 0 : index
    %c0_11 = arith.constant 0 : index
    %32 = vector.load %arg6[%c0_10, %c0_11] : memref<16x128xf32, #tpu.memory_space<vmem>>, vector<16x128xf32>
    tpu.vector_store %arg6[%c0_10, %c0_11], %31 {strides = array<i32>} : memref<16x128xf32, #tpu.memory_space<vmem>>, vector<16x128xf32>,
    return
  }
  func.func @transform_0(%arg0: i32) -> (i32, i32) {
    %c0_i32 = arith.constant 0 : i32
    %c0_i32_0 = arith.constant 0 : i32
    %c0_i32_1 = arith.constant 0 : i32
    return %c0_i32, %c0_i32_0 : i32, i32
  }
  func.func @transform_1(%arg0: i32) -> (i32, i32) {
    %c0_i32 = arith.constant 0 : i32
    %c0_i32_0 = arith.constant 0 : i32
    %c0_i32_1 = arith.constant 0 : i32
    return %c0_i32, %c0_i32_0 : i32, i32
  }
  func.func @transform_2(%arg0: i32) -> (i32, i32) {
    %c0_i32 = arith.constant 0 : i32
    %c0_i32_0 = arith.constant 0 : i32
    %c0_i32_1 = arith.constant 0 : i32
    return %c0_i32, %c0_i32_0 : i32, i32
  }
  func.func @transform_3(%arg0: i32) -> (i32, i32) {
    %c0_i32 = arith.constant 0 : i32
    %c0_i32_0 = arith.constant 0 : i32
    %c0_i32_1 = arith.constant 0 : i32
    return %c0_i32, %c0_i32_0 : i32, i32
  }
  func.func @transform_4(%arg0: i32) -> (i32, i32) {
    %c0_i32 = arith.constant 0 : i32
    %c0_i32_0 = arith.constant 0 : i32
    return %arg0, %c0_i32 : i32, i32
  }
  func.func @transform_5(%arg0: i32) -> (i32, i32) {
    %c0_i32 = arith.constant 0 : i32
    %c0_i32_0 = arith.constant 0 : i32
    return %arg0, %c0_i32 : i32, i32
  }
}

</mosaic_0001>

<llo_original>
// kernel: tpu_custom_call.1
$region0: #{tpu_custom_call.1}
  #allocation0 [shape = 'u32[]', space=smem, size = 0x4, offset = 0x4, fixed_abs, tag = 'smem constant byte address 0x4 - core index']
  #allocation1 [shape = 'u32[72,128]{1,0:T(1,128)}', space=vmem, size = 0x9000, scoped, tag = 'internal scratch']
  %s0 = inlined_call_operand.vmem [shape: f32[2,128], index: 0, kind: input, shape index: {}]
  %s1 = inlined_call_operand.vmem [shape: f32[2,128], index: 1, kind: input, shape index: {}]
  %s2 = inlined_call_operand.vmem [shape: f32[2,128], index: 2, kind: input, shape index: {}]
  %s3 = inlined_call_operand.vmem [shape: f32[2,128], index: 3, kind: input, shape index: {}]
  %s4 = inlined_call_operand.hbm [shape: f32[16,128], index: 4, kind: input, shape index: {}, may-alias: {4,5}]
  %s5 = inlined_call_operand.hbm [shape: f32[16,128], index: 5, kind: output, shape index: {}, may-alias: {4,5}]
  %s6 = sld [smem:[#allocation0]]
  $region34: #{tpu_custom_call.1} parent=0
    _
  %s8 = ssub.s32 1, %s6
  %s9 = scalar_select 0, %s8, %s6
  $region1: #{tpu_custom_call.1} parent=0
    #allocation2 [shape = 'u8[8192]{0}', space=vmem, size = 0x2000, scoped, tag = 'input window, operand 4, single buffered']
    #allocation3 [shape = 's32[1]{0}', space=sflag, size = 0x4, scoped, tag = 'scoped memory for tpu_custom_call.1']
    #allocation4 [shape = 's32[1]{0}', space=sflag, size = 0x4, scoped, tag = 'scoped memory for tpu_custom_call.1']
    #allocation5 [shape = 'u8[8192]{0}', space=vmem, size = 0x2000, scoped, tag = 'output window, operand 0, single buffered']
    %10 = vsyncpa [#allocation3], 0
    %11 = vsyncpa [#allocation4], 0
    // Predicated region
    $region2: #{tpu_custom_call.1} parent=1 // pred_check
      _
    $region3: #{tpu_custom_call.1} parent=1 // pred_check_branch
      %13 = sbr.rel (0) target = $region5
    $region4: #{tpu_custom_call.1} parent=1 // pred_region
      _
    $region5: #{tpu_custom_call.1} parent=1 // pred_fallthru
      _
    // Predicated region
    $region6: #{tpu_custom_call.1} parent=1 // pred_check
      _
    $region7: #{tpu_custom_call.1} parent=1 // pred_check_branch
      %15 = sbr.rel (0) target = $region9
    $region8: #{tpu_custom_call.1} parent=1 // pred_region
      _
    $region9: #{tpu_custom_call.1} parent=1 // pred_fallthru
      _
    // Predicated region
    $region10: #{tpu_custom_call.1} parent=1 // pred_check
      _
    $region11: #{tpu_custom_call.1} parent=1 // pred_check_branch
      %17 = sbr.rel (0) target = $region13
    $region12: #{tpu_custom_call.1} parent=1 // pred_region
      _
    $region13: #{tpu_custom_call.1} parent=1 // pred_fallthru
      _
    // Predicated region
    $region14: #{tpu_custom_call.1} parent=1 // pred_check
      _
    $region15: #{tpu_custom_call.1} parent=1 // pred_check_branch
      %19 = sbr.rel (0) target = $region17
    $region16: #{tpu_custom_call.1} parent=1 // pred_region
      _
    $region17: #{tpu_custom_call.1} parent=1 // pred_fallthru
      _
    // Predicated region
    $region18: #{tpu_custom_call.1} parent=1 // pred_check
      _
    $region19: #{tpu_custom_call.1} parent=1 // pred_check_branch
      %21 = sbr.rel (0) target = $region21
    $region20: #{tpu_custom_call.1} parent=1 // pred_region
      %23 = vsyncadd [#allocation3], 0
      %s24 = sshll.u32 %s4, 4
      %s25 = int_to_ptr.hbm [resolvable:$true] %s24
      %s26 = sshll.u32 [#allocation2], 4
      %s27 = int_to_ptr.vmem [resolvable:$true] %s26
      %32 = dma.hbm_to_vmem [thread:$0]  %s25, 256, %s27, [#allocation3], 128, 128, 8
    $region21: #{tpu_custom_call.1} parent=1 // pred_fallthru
      _
    // Predicated region
    $region22: #{tpu_custom_call.1} parent=1 // pred_check
      _
    $region23: #{tpu_custom_call.1} parent=1 // pred_check_branch
      %34 = sbr.rel (0) target = $region25
    $region24: #{tpu_custom_call.1} parent=1 // pred_region
      %36 = dma.done [#allocation3], 256
    $region25: #{tpu_custom_call.1} parent=1 // pred_fallthru
      _
    %v37 = vld [vmem:[#allocation2] sm:$0xff]
    %v38 = vld [vmem:[#allocation2 + $0x8] sm:$0xff]
    %v39 = vld [vmem:[%s0] sm:$0x3]
    %40 = vmatpush.xpose.msra.mxu0 0.0
    %41 = vmatpush.xpose.msra.mxu0 0.0
    %42 = vmatpush.xpose.msra.mxu0 0.0
    %43 = vmatpush.xpose.msra.mxu0 0.0
    %44 = vmatpush.xpose.msra.mxu0 0.0
    %45 = vmatpush.xpose.msra.mxu0 0.0
    %46 = vmatpush.xpose.msra.mxu0 0.0
    %47 = vmatpush.xpose.msra.mxu0 0.0
    %48 = vmatpush.xpose.msra.mxu0 0.0
    %49 = vmatpush.xpose.msra.mxu0 0.0
    %50 = vmatpush.xpose.msra.mxu0 0.0
    %51 = vmatpush.xpose.msra.mxu0 0.0
    %52 = vmatpush.xpose.msra.mxu0 0.0
    %53 = vmatpush.xpose.msra.mxu0 0.0
    %54 = vmatpush.xpose.msra.mxu0 0.0
    %55 = vmatpush.xpose.msra.mxu0 %v39
    %56 = vmatmul.f32.gmra.mxu0 %v37
    %v57 = vpop.f32.mrf.mxu0
    %v58 = vadd.f32 0.0, %v57
    %59 = vmatmul.f32.gmra.mxu0 %v38
    %v60 = vpop.f32.mrf.mxu0
    %v61 = vadd.f32 0.0, %v60
    %62 = vdwg.mxu0
    %v63 = vld [vmem:[%s1] sm:$0x3]
    %65 = vset.pattern.permute.xlu0 0
    %66 = vperm.xlu0 %65, %v58
    %v67 = vpop.permute.xlu0 %66
    %70 = vset.pattern.permute.xlu0 0
    %71 = vperm.xlu0 %70, %v61
    %v72 = vpop.permute.xlu0 %71
    %v74 = vperm.slane %v63, 0
    %v75 = vmul.f32 %v67, %v74
    %v76 = vmul.f32 %v72, %v74
    %77 = vset.pattern.permute.xlu0 1
    %78 = vperm.xlu0 %77, %v58
    %v79 = vpop.permute.xlu0 %78
    %81 = vset.pattern.permute.xlu0 1
    %82 = vperm.xlu0 %81, %v61
    %v83 = vpop.permute.xlu0 %82
    %v85 = vperm.slane %v63, 1
    %v86 = vmul.f32 %v79, %v85
    %v87 = vmul.f32 %v83, %v85
    %v88 = vadd.f32 %v75, %v86
    %v89 = vadd.f32 %v76, %v87
    %v90 = vsub.f32 %v37, %v88
    %v91 = vsub.f32 %v38, %v89
    %v92 = vand.u32 2147483647, %v90
    %v93 = vand.u32 2147483647, %v91
    %v94 = vld [vmem:[%s2] sm:$0x3]
    %95 = vmatpush.xpose.msra.mxu0 0.0
    %96 = vmatpush.xpose.msra.mxu0 0.0
    %97 = vmatpush.xpose.msra.mxu0 0.0
    %98 = vmatpush.xpose.msra.mxu0 0.0
    %99 = vmatpush.xpose.msra.mxu0 0.0
    %100 = vmatpush.xpose.msra.mxu0 0.0
    %101 = vmatpush.xpose.msra.mxu0 0.0
    %102 = vmatpush.xpose.msra.mxu0 0.0
    %103 = vmatpush.xpose.msra.mxu0 0.0
    %104 = vmatpush.xpose.msra.mxu0 0.0
    %105 = vmatpush.xpose.msra.mxu0 0.0
    %106 = vmatpush.xpose.msra.mxu0 0.0
    %107 = vmatpush.xpose.msra.mxu0 0.0
    %108 = vmatpush.xpose.msra.mxu0 0.0
    %109 = vmatpush.xpose.msra.mxu0 0.0
    %110 = vmatpush.xpose.msra.mxu0 %v94
    %111 = vmatmul.f32.gmra.mxu0 %v92
    %v112 = vpop.f32.mrf.mxu0
    %v113 = vadd.f32 0.0, %v112
    %114 = vmatmul.f32.gmra.mxu0 %v93
    %v115 = vpop.f32.mrf.mxu0
    %v116 = vadd.f32 0.0, %v115
    %117 = vdwg.mxu0
    %v118 = vld [vmem:[%s3] sm:$0x3]
    %120 = vset.pattern.permute.xlu0 0
    %121 = vperm.xlu0 %120, %v113
    %v122 = vpop.permute.xlu0 %121
    %125 = vset.pattern.permute.xlu0 0
    %126 = vperm.xlu0 %125, %v116
    %v127 = vpop.permute.xlu0 %126
    %v129 = vperm.slane %v118, 0
    %v130 = vmul.f32 %v122, %v129
    %v131 = vmul.f32 %v127, %v129
    %132 = vset.pattern.permute.xlu0 1
    %133 = vperm.xlu0 %132, %v113
    %v134 = vpop.permute.xlu0 %133
    %136 = vset.pattern.permute.xlu0 1
    %137 = vperm.xlu0 %136, %v116
    %v138 = vpop.permute.xlu0 %137
    %v140 = vperm.slane %v118, 1
    %v141 = vmul.f32 %v134, %v140
    %v142 = vmul.f32 %v138, %v140
    %v143 = vadd.f32 %v130, %v141
    %v144 = vadd.f32 %v131, %v142
    %v145 = vsub.f32 %v92, %v143
    %v146 = vsub.f32 %v93, %v144
    %147 = vst [vmem:[#allocation5] sm:$0xff] %v145
    %148 = vst [vmem:[#allocation5 + $0x8] sm:$0xff] %v146
    // Predicated region
    $region26: #{tpu_custom_call.1} parent=1 // pred_check
      _
    $region27: #{tpu_custom_call.1} parent=1 // pred_check_branch
      %150 = sbr.rel (0) target = $region29
    $region28: #{tpu_custom_call.1} parent=1 // pred_region
      %152 = vsyncadd [#allocation4], 0
      %s153 = sshll.u32 [#allocation5], 4
      %s154 = int_to_ptr.vmem [resolvable:$true] %s153
      %s155 = sshll.u32 %s5, 4
      %s156 = int_to_ptr.hbm [resolvable:$true] %s155
      %161 = dma.vmem_to_hbm [thread:$0]  %s154, 256, %s156, [#allocation4], 128, 128, 8
    $region29: #{tpu_custom_call.1} parent=1 // pred_fallthru
      _
    // Predicated region
    $region30: #{tpu_custom_call.1} parent=1 // pred_check
      _
    $region31: #{tpu_custom_call.1} parent=1 // pred_check_branch
      %163 = sbr.rel (0) target = $region33
    $region32: #{tpu_custom_call.1} parent=1 // pred_region
      %165 = dma.done [#allocation4], 256
    $region33: #{tpu_custom_call.1} parent=1 // pred_fallthru
      _
    %166 = vsyncpa [#allocation3], 1
    %167 = vsyncpa [#allocation4], 1

</llo_original>
